<compile_context>
chip_gen: v7x
topology: tpu7x:2x2x1
jax: 0.10.0
libtpu: 0.0.40
codegen_flags: <defaults>
</compile_context>

<pallas_src>
import jax
import jax.numpy as jnp
from jax.experimental import pallas as pl
from jax.experimental.pallas import tpu as pltpu


def _hard_sigmoid_kernel(x_ref, o_ref):
    x = x_ref[...]
    # hard_sigmoid(x) = relu6(x + 3) / 6 == clamp(x + 3, 0, 6) / 6
    # Computed in the input dtype (no f32 upcast needed for add/clip/div).
    o_ref[...] = (jnp.clip(x + 3.0, 0.0, 6.0) / 6.0).astype(o_ref.dtype)


def _round_up(a, b):
    return ((a + b - 1) // b) * b


def hard_sigmoid(x):
    """Elementwise hard-sigmoid via a Pallas TPU kernel. Accepts any shape."""
    orig_shape = x.shape
    dtype = x.dtype
    n = x.size
    if n == 0:
        return x

    itemsize = jnp.dtype(dtype).itemsize
    # Sublane packing factor: f32 -> 8 rows, bf16/f16 -> 16, int8/fp8 -> 32.
    pack = 8 * max(1, 4 // itemsize)

    # Fast path: pick the widest lane-dense last dim (multiple of 128) that lets
    # us reshape with NO padding copy (pad would double HBM traffic for a
    # mem-bound op). Fall back to a padded slab only for awkward sizes.
    lanes = None
    for cand in (1024, 512, 256, 128):
        if n % cand == 0 and (n // cand) % pack == 0:
            lanes = cand
            break

    if lanes is not None:
        rows = n // lanes
        x2d = x.reshape(rows, lanes)  # no pad copy on the common path
        padded = False
    else:
        lanes = 1024 if n >= 1024 else 128
        rows = _round_up(pl.cdiv(n, lanes), pack)
        x2d = jnp.pad(jnp.ravel(x), (0, rows * lanes - n)).reshape(rows, lanes)
        padded = True

    # Block sizing: ~2 MiB per block => (in + out) double-buffered ~= 8 MiB VMEM,
    # well inside the default scoped VMEM limit on v5e (16 MiB) / v6e / v7x (32 MiB).
    target_block_bytes = 2 * 1024 * 1024
    block_rows = max(pack, (target_block_bytes // (lanes * itemsize)) // pack * pack)
    block_rows = min(block_rows, rows)
    # Keep at least 2 grid steps when the array is big enough so both
    # TensorCores on v7x get work (no-op on v5e/v6e single-TC chips).
    if rows > pack and pl.cdiv(rows, block_rows) < 2:
        block_rows = max(pack, _round_up(pl.cdiv(rows, 2), pack))

    grid = (pl.cdiv(rows, block_rows),)  # ragged last block handled by Pallas

    out2d = pl.pallas_call(
        _hard_sigmoid_kernel,
        out_shape=jax.ShapeDtypeStruct((rows, lanes), dtype),
        grid_spec=pltpu.PrefetchScalarGridSpec(
            num_scalar_prefetch=0,
            grid=grid,
            in_specs=[pl.BlockSpec((block_rows, lanes), lambda i: (i, 0))],
            out_specs=pl.BlockSpec((block_rows, lanes), lambda i: (i, 0)),
        ),
        compiler_params=pltpu.CompilerParams(
            dimension_semantics=("parallel",),
        ),
        cost_estimate=pl.CostEstimate(
            flops=3 * n,
            transcendentals=0,
            bytes_accessed=2 * n * itemsize,
        ),
    )(x2d)

    if padded:
        return out2d.reshape(-1)[:n].reshape(orig_shape)
    return out2d.reshape(orig_shape)


if __name__ == "__main__":
    key = jax.random.PRNGKey(0)

    # NCHW input consistent with a conv-style feature map.
    x = jax.random.normal(key, (2, 4, 16, 16), dtype=jnp.float32) * 4.0
    y = jax.block_until_ready(hard_sigmoid(x))
    y_ref = jnp.clip(x + 3.0, 0.0, 6.0) / 6.0
    assert y.shape == x.shape and y.dtype == x.dtype
    assert jnp.allclose(y, y_ref, atol=1e-6), "mismatch vs reference (f32)"

    # Odd-sized input exercises the padded fallback path.
    x_odd = jax.random.normal(jax.random.PRNGKey(1), (3, 5, 7), dtype=jnp.float32) * 4.0
    y_odd = jax.block_until_ready(hard_sigmoid(x_odd))
    y_odd_ref = jnp.clip(x_odd + 3.0, 0.0, 6.0) / 6.0
    assert y_odd.shape == x_odd.shape
    assert jnp.allclose(y_odd, y_odd_ref, atol=1e-6), "mismatch vs reference (padded path)"

    print("KERNEL_OK")
</pallas_src>

<mosaic_0001>
module attributes {stable_mosaic.version = 11 : i64} {
  func.func @_hard_sigmoid_kernel(%arg0: i32, %arg1: memref<8x256xf32, #tpu.memory_space<vmem>>, %arg2: memref<8x256xf32, #tpu.memory_space<vmem>>) attributes {dimension_semantics = [#tpu.dimension_semantics<parallel>], iteration_bounds = array<i64: 1>, scalar_prefetch = 0 : i64, scratch_operands = 0 : i64, tpu.core_type = #tpu.core_type<tc>, window_params = [{transform_indices = @transform_0, window_bounds = array<i64: 8, 256>}, {transform_indices = @transform_1, window_bounds = array<i64: 8, 256>}]} {
    %c0 = arith.constant 0 : index
    %c0_0 = arith.constant 0 : index
    %0 = vector.load %arg1[%c0, %c0_0] : memref<8x256xf32, #tpu.memory_space<vmem>>, vector<8x256xf32>
    %cst = arith.constant 3.000000e+00 : f32
    %1 = vector.broadcast %cst : f32 to vector<8x256xf32>
    %2 = arith.addf %0, %1 : vector<8x256xf32>
    %cst_1 = arith.constant 0.000000e+00 : f32
    %cst_2 = arith.constant 6.000000e+00 : f32
    %3 = vector.broadcast %cst_1 : f32 to vector<8x256xf32>
    %4 = arith.maximumf %3, %2 : vector<8x256xf32>
    %5 = vector.broadcast %cst_2 : f32 to vector<8x256xf32>
    %6 = arith.minimumf %5, %4 : vector<8x256xf32>
    %cst_3 = arith.constant 6.000000e+00 : f32
    %7 = vector.broadcast %cst_3 : f32 to vector<8x256xf32>
    %8 = arith.divf %6, %7 : vector<8x256xf32>
    %c0_4 = arith.constant 0 : index
    %c0_5 = arith.constant 0 : index
    %9 = vector.load %arg2[%c0_4, %c0_5] : memref<8x256xf32, #tpu.memory_space<vmem>>, vector<8x256xf32>
    tpu.vector_store %arg2[%c0_4, %c0_5], %8 {strides = array<i32>} : memref<8x256xf32, #tpu.memory_space<vmem>>, vector<8x256xf32>,
    return
  }
  func.func @transform_0(%arg0: i32) -> (i32, i32) {
    %c0_i32 = arith.constant 0 : i32
    %c0_i32_0 = arith.constant 0 : i32
    return %arg0, %c0_i32 : i32, i32
  }
  func.func @transform_1(%arg0: i32) -> (i32, i32) {
    %c0_i32 = arith.constant 0 : i32
    %c0_i32_0 = arith.constant 0 : i32
    return %arg0, %c0_i32 : i32, i32
  }
}

</mosaic_0001>

<llo_original>
// kernel: tpu_custom_call.1
$region0: #{tpu_custom_call.1}
  #allocation0 [shape = 'u32[]', space=smem, size = 0x4, offset = 0x4, fixed_abs, tag = 'smem constant byte address 0x4 - core index']
  #allocation1 [shape = 'u32[144,128]{1,0:T(1,128)}', space=vmem, size = 0x12000, scoped, tag = 'internal scratch']
  %s0 = inlined_call_operand.hbm [shape: f32[8,256], index: 0, kind: input, shape index: {}]
  %s1 = inlined_call_operand.hbm [shape: f32[8,256], index: 1, kind: output, shape index: {}]
  %s2 = sld [smem:[#allocation0]]
  $region18: #{tpu_custom_call.1} parent=0
    _
  %s4 = ssub.s32 1, %s2
  %s5 = scalar_select 0, %s4, %s2
  $region1: #{tpu_custom_call.1} parent=0
    #allocation2 [shape = 'u8[8192]{0}', space=vmem, size = 0x2000, scoped, tag = 'input window, operand 0, single buffered']
    #allocation3 [shape = 's32[1]{0}', space=sflag, size = 0x4, scoped, tag = 'scoped memory for tpu_custom_call.1']
    #allocation4 [shape = 's32[1]{0}', space=sflag, size = 0x4, scoped, tag = 'scoped memory for tpu_custom_call.1']
    #allocation5 [shape = 'u8[8192]{0}', space=vmem, size = 0x2000, scoped, tag = 'output window, operand 0, single buffered']
    %6 = vsyncpa [#allocation3], 0
    %7 = vsyncpa [#allocation4], 0
    // Predicated region
    $region2: #{tpu_custom_call.1} parent=1 // pred_check
      _
    $region3: #{tpu_custom_call.1} parent=1 // pred_check_branch
      %9 = sbr.rel (0) target = $region5
    $region4: #{tpu_custom_call.1} parent=1 // pred_region
      %s11 = ssub.s32 256, 256
      %12 = vsyncadd [#allocation3], %s11
      %s14 = sshll.u32 [#allocation2], 4
      %s15 = int_to_ptr.vmem [resolvable:$true] %s14
      %17 = dma.hbm_to_vmem [thread:$0]  %s0, 256, %s15, [#allocation3]
    $region5: #{tpu_custom_call.1} parent=1 // pred_fallthru
      _
    // Predicated region
    $region6: #{tpu_custom_call.1} parent=1 // pred_check
      _
    $region7: #{tpu_custom_call.1} parent=1 // pred_check_branch
      %19 = sbr.rel (0) target = $region9
    $region8: #{tpu_custom_call.1} parent=1 // pred_region
      %20 = dma.done [#allocation3], 256
    $region9: #{tpu_custom_call.1} parent=1 // pred_fallthru
      _
    %v21 = vld [vmem:[#allocation2] sm:$0xff]
    %v22 = vld [vmem:[#allocation2 + $0x8] sm:$0xff]
    %v23 = vadd.f32 %v21, 3.0
    %v24 = vadd.f32 %v22, 3.0
    %v25 = vmax.f32 %v23, 0.0
    %v26 = vmax.f32 %v24, 0.0
    %v27 = vmin.f32 %v25, 6.0
    %v28 = vmin.f32 %v26, 6.0
    %v29 = vrcp.pop 6.0
    %v30 = vmul.f32 %v27, %v29
    %v31 = vmul.f32 %v28, %v29
    %32 = vst [vmem:[#allocation5] sm:$0xff] %v30
    %33 = vst [vmem:[#allocation5 + $0x8] sm:$0xff] %v31
    // Predicated region
    $region10: #{tpu_custom_call.1} parent=1 // pred_check
      _
    $region11: #{tpu_custom_call.1} parent=1 // pred_check_branch
      %35 = sbr.rel (0) target = $region13
    $region12: #{tpu_custom_call.1} parent=1 // pred_region
      %s37 = ssub.s32 256, 256
      %38 = vsyncadd [#allocation4], %s37
      %s40 = sshll.u32 [#allocation5], 4
      %s41 = int_to_ptr.vmem [resolvable:$true] %s40
      %43 = dma.vmem_to_hbm [thread:$0]  %s41, 256, %s1, [#allocation4]
    $region13: #{tpu_custom_call.1} parent=1 // pred_fallthru
      _
    // Predicated region
    $region14: #{tpu_custom_call.1} parent=1 // pred_check
      _
    $region15: #{tpu_custom_call.1} parent=1 // pred_check_branch
      %45 = sbr.rel (0) target = $region17
    $region16: #{tpu_custom_call.1} parent=1 // pred_region
      %46 = dma.done [#allocation4], 256
    $region17: #{tpu_custom_call.1} parent=1 // pred_fallthru
      _
    %47 = vsyncpa [#allocation3], 1
    %48 = vsyncpa [#allocation4], 1

</llo_original>
